<compile_context>
chip_gen: v7x
topology: tpu7x:2x2x1
jax: 0.10.0
libtpu: 0.0.40
codegen_flags: <defaults>
</compile_context>

<pallas_src>
import functools
import math

import jax
import jax.numpy as jnp
import numpy as np
from jax import lax
from jax.experimental import pallas as pl
from jax.experimental.pallas import tpu as pltpu

LANE = 128
_VMEM_LIMIT = 48 * 1024 * 1024  # safe on v5e/v6e (128 MiB phys) and v7x (64 MiB phys)


def _round_up(x, m):
    return ((x + m - 1) // m) * m


def _pad2d(a, rows, cols):
    r, c = a.shape
    return jnp.pad(a, ((0, rows - r), (0, cols - c)))


# ----------------------------------------------------------------------------
# Kernel 1: row-tiled matmul + bias  (hoisted, non-recurrent layer-0 projection)
#   out = x @ w_t + b ;  w_t/b resident in VMEM, rows tiled (>=2 blocks).
# ----------------------------------------------------------------------------
def _matmul_bias_kernel(x_ref, w_ref, b_ref, o_ref, *, cdt):
    x = x_ref[...].astype(cdt)
    o_ref[...] = (
        jnp.dot(x, w_ref[...], preferred_element_type=jnp.float32) + b_ref[...]
    )


def _pick_row_tile(n, max_tile=512):
    if n <= 8:
        return n
    if n <= max_tile:
        # at least 2 grid blocks (megacore), multiple of 8 sublanes
        return min(_round_up(pl.cdiv(n, 2), 8), _round_up(n, 8))
    return max_tile


def matmul_bias(x, w_t, b_row, *, cdt):
    """x: (N, K) f32, w_t: (K, M) pre-transposed (cdt), b_row: (1, M) f32 -> (N, M) f32."""
    n, k = x.shape
    _, m = w_t.shape
    tn = _pick_row_tile(n)
    cost = pl.CostEstimate(
        flops=int(2 * n * k * m),
        transcendentals=0,
        bytes_accessed=int(
            x.size * x.dtype.itemsize + w_t.size * w_t.dtype.itemsize
            + b_row.size * 4 + n * m * 4),
    )
    return pl.pallas_call(
        functools.partial(_matmul_bias_kernel, cdt=cdt),
        out_shape=jax.ShapeDtypeStruct((n, m), jnp.float32),
        grid=(pl.cdiv(n, tn),),
        in_specs=[
            pl.BlockSpec((tn, k), lambda i: (i, 0)),
            pl.BlockSpec((k, m), lambda i: (0, 0)),   # weight resident
            pl.BlockSpec((1, m), lambda i: (0, 0)),   # bias resident
        ],
        out_specs=pl.BlockSpec((tn, m), lambda i: (i, 0)),
        compiler_params=pltpu.CompilerParams(
            dimension_semantics=("parallel",),
            vmem_limit_bytes=_VMEM_LIMIT),
        cost_estimate=cost,
    )(x, w_t, b_row)


# ----------------------------------------------------------------------------
# Kernel 2: fused multi-layer RNN recurrence + FC epilogue.
#   grid = (batch_blocks, seq_tiles), dims = ("parallel", "arbitrary")
#   xp / out streamed; weights resident; hidden carry in persistent VMEM scratch.
# ----------------------------------------------------------------------------
def _make_rnn_fc_kernel(n_layers, seq_tile, cdt):
    multi = n_layers > 1

    def kernel(*refs):
        if multi:
            (xp_ref, whh0_ref, wcat_ref, bcat_ref, fcw_ref, fcb_ref,
             out_ref, hfin_ref, h_carry) = refs
        else:
            xp_ref, whh0_ref, fcw_ref, fcb_ref, out_ref, hfin_ref, h_carry = refs
            wcat_ref = bcat_ref = None

        s = pl.program_id(1)

        # Reset the hidden-state carry at the start of each batch-block's
        # sequence sweep (scratch persists across grid steps).
        @pl.when(s == 0)
        def _():
            h_carry[...] = jnp.zeros_like(h_carry)

        def step(t, hs):
            # Layer 0: the x-projection (incl. merged biases) was hoisted out
            # of the recurrence into xp.
            h0 = jnp.tanh(
                xp_ref[t]
                + jnp.dot(hs[0].astype(cdt), whh0_ref[...],
                          preferred_element_type=jnp.float32))
            new_hs = [h0]
            top = h0
            for l in range(1, n_layers):
                # Fused ih/hh matmul: [x_l, h_l] @ [W_ih^T ; W_hh^T]  (one MXU dot)
                cat = jnp.concatenate([top, hs[l]], axis=-1).astype(cdt)
                pre = (jnp.dot(cat, wcat_ref[l - 1],
                               preferred_element_type=jnp.float32)
                       + bcat_ref[l - 1])
                hl = jnp.tanh(pre)
                new_hs.append(hl)
                top = hl
            # Fused FC epilogue: the (seq, batch, hp) hidden sequence never
            # touches HBM; only the lane-dense (op) output is written.
            out_ref[t] = (jnp.dot(top.astype(cdt), fcw_ref[...],
                                  preferred_element_type=jnp.float32)
                          + fcb_ref[...])
            return tuple(new_hs)

        hs0 = tuple(h_carry[l] for l in range(n_layers))
        # Bounded unroll: LLO visibility without blowing vreg live ranges.
        hs = lax.fori_loop(0, seq_tile, step, hs0, unroll=min(seq_tile, 8))
        for l in range(n_layers):
            h_carry[l] = hs[l]

        # Final hidden state goes to HBM once, at the last seq tile.
        @pl.when(s == pl.num_programs(1) - 1)
        def _():
            hfin_ref[...] = h_carry[...]

    return kernel


def _pick_seq_tile(seq, max_tile=16):
    for t in range(min(seq, max_tile), 0, -1):
        if seq % t == 0:
            return t
    return 1


def _pick_batch_tile(batch):
    # Give v7x's 2nd TensorCore independent batch work (2 "parallel" blocks)
    # when the split stays sublane-aligned; no-op on 1-TC chips.
    if batch >= 32 and batch % 32 == 0:
        return batch // 2
    return batch


def stacked_rnn_fc(xp, whh0_t, wcat_t, bcat, fcw_t, fcb_row, *, n_layers,
                   compute_dtype, max_seq_tile=16):
    """xp: (seq, batch, hp) f32 (layer-0 projection incl. biases).
    Returns (out (seq, batch, op) f32, h_final (n_layers, batch, hp) f32)."""
    seq, batch, hp = xp.shape
    op = fcw_t.shape[1]
    multi = n_layers > 1

    T = _pick_seq_tile(seq, max_seq_tile)
    TB = _pick_batch_tile(batch)
    nb, ns = batch // TB, seq // T

    kernel = _make_rnn_fc_kernel(n_layers, T, compute_dtype)

    in_specs = [pl.BlockSpec((T, TB, hp), lambda b, s: (s, b, 0)),   # xp streamed
                pl.BlockSpec((hp, hp), lambda b, s: (0, 0))]         # whh0 resident
    inputs = [xp, whh0_t]
    if multi:
        in_specs += [pl.BlockSpec((n_layers - 1, 2 * hp, hp), lambda b, s: (0, 0, 0)),
                     pl.BlockSpec((n_layers - 1, 1, hp), lambda b, s: (0, 0, 0))]
        inputs += [wcat_t, bcat]
    in_specs += [pl.BlockSpec((hp, op), lambda b, s: (0, 0)),        # fc_w resident
                 pl.BlockSpec((1, op), lambda b, s: (0, 0))]         # fc_b resident
    inputs += [fcw_t, fcb_row]

    out_specs = (pl.BlockSpec((T, TB, op), lambda b, s: (s, b, 0)),        # out streamed
                 pl.BlockSpec((n_layers, TB, hp), lambda b, s: (0, b, 0)))  # hfin
    out_shape = (jax.ShapeDtypeStruct((seq, batch, op), jnp.float32),
                 jax.ShapeDtypeStruct((n_layers, batch, hp), jnp.float32))

    wbytes = (whh0_t.size * whh0_t.dtype.itemsize
              + fcw_t.size * fcw_t.dtype.itemsize + (hp + op) * 4)
    if multi:
        wbytes += wcat_t.size * wcat_t.dtype.itemsize + bcat.size * 4
    cost = pl.CostEstimate(
        flops=int(2 * seq * batch * (hp * hp + (n_layers - 1) * 2 * hp * hp + hp * op)),
        transcendentals=int(seq * batch * hp * n_layers),
        bytes_accessed=int(xp.size * 4 + seq * batch * op * 4
                           + n_layers * batch * hp * 4 + wbytes),
    )

    return pl.pallas_call(
        kernel,
        grid=(nb, ns),
        in_specs=in_specs,
        out_specs=out_specs,
        out_shape=out_shape,
        scratch_shapes=[pltpu.VMEM((n_layers, TB, hp), jnp.float32)],
        compiler_params=pltpu.CompilerParams(
            dimension_semantics=("parallel", "arbitrary"),
            vmem_limit_bytes=_VMEM_LIMIT),
        cost_estimate=cost,
    )(*inputs)


# ----------------------------------------------------------------------------
# Model wrapper (param init mimics torch.nn.RNN / nn.Linear U(-1/sqrt(h), 1/sqrt(h))).
# ----------------------------------------------------------------------------
class PallasRNNModel:
    def __init__(self, input_size, output_size, hidden_dim, n_layers, key,
                 compute_dtype=jnp.float32):
        self.input_size = input_size
        self.output_size = output_size
        self.hidden_dim = hidden_dim
        self.n_layers = n_layers
        self.compute_dtype = compute_dtype
        self.hp = _round_up(hidden_dim, LANE)    # lane-dense padded hidden
        self.op = _round_up(output_size, LANE)   # lane-dense padded FC output

        k = 1.0 / math.sqrt(hidden_dim)
        keys = jax.random.split(key, 4 * n_layers + 2)
        ki = 0
        self.rnn_params = []   # original (PyTorch-layout) fp32 params, used by the reference
        for layer in range(n_layers):
            in_dim = input_size if layer == 0 else hidden_dim
            w_ih = jax.random.uniform(keys[ki], (hidden_dim, in_dim), jnp.float32, -k, k); ki += 1
            w_hh = jax.random.uniform(keys[ki], (hidden_dim, hidden_dim), jnp.float32, -k, k); ki += 1
            b_ih = jax.random.uniform(keys[ki], (hidden_dim,), jnp.float32, -k, k); ki += 1
            b_hh = jax.random.uniform(keys[ki], (hidden_dim,), jnp.float32, -k, k); ki += 1
            self.rnn_params.append((w_ih, w_hh, b_ih, b_hh))
        self.fc_w = jax.random.uniform(keys[ki], (output_size, hidden_dim), jnp.float32, -k, k); ki += 1
        self.fc_b = jax.random.uniform(keys[ki], (output_size,), jnp.float32, -k, k)

        # Kernel-side params: pre-transposed, biases merged, lane-padded to 128,
        # ih/hh fused for layers >= 1.
        # Padded-lane INVARIANT: padded weight rows/cols and padded bias lanes are
        # exactly zero, so padded hidden lanes stay zero through the recurrence
        # (tanh(0)=0) and are sliced off before returning. This breaks if the
        # activation is changed to one with f(0)!=0 or a bias is written into
        # padded lanes.
        hp, op, cdt = self.hp, self.op, compute_dtype
        w_ih0, w_hh0, b_ih0, b_hh0 = self.rnn_params[0]
        self.w_ih0_t = _pad2d(w_ih0.T, input_size, hp).astype(cdt)        # (in, hp)
        self.b0 = _pad2d((b_ih0 + b_hh0)[None, :], 1, hp)                 # (1, hp) f32
        self.w_hh0_t = _pad2d(w_hh0.T, hp, hp).astype(cdt)                # (hp, hp)

        wcat_list, bcat_list = [], []
        for (w_ih, w_hh, b_ih, b_hh) in self.rnn_params[1:]:
            wcat_list.append(jnp.concatenate(
                [_pad2d(w_ih.T, hp, hp), _pad2d(w_hh.T, hp, hp)], axis=0))  # (2hp, hp)
            bcat_list.append(_pad2d((b_ih + b_hh)[None, :], 1, hp))
        self.w_cat_t = jnp.stack(wcat_list).astype(cdt) if n_layers > 1 else None
        self.b_cat = jnp.stack(bcat_list) if n_layers > 1 else None         # (L-1, 1, hp) f32

        self.fc_w_t = _pad2d(self.fc_w.T, hp, op).astype(cdt)               # (hp, op)
        self.fc_b_row = _pad2d(self.fc_b[None, :], 1, op)                   # (1, op) f32

    def __call__(self, x):
        """x: (batch, seq, input_size) [batch_first=True].
        Returns (out (batch*seq, output_size), hidden (n_layers, batch, hidden_dim))."""
        batch, seq, in_dim = x.shape
        x = x.astype(jnp.float32)

        # Hoisted layer-0 projection: one row-tiled MXU matmul over all timesteps,
        # emitted seq-major for the recurrence kernel. (This transpose only touches
        # batch*seq*input_size elements; the big hp-sized transposes are gone.)
        x_sm = jnp.transpose(x, (1, 0, 2)).reshape(seq * batch, in_dim)
        xp = matmul_bias(x_sm, self.w_ih0_t, self.b0, cdt=self.compute_dtype)
        xp = xp.reshape(seq, batch, self.hp)

        # Fused recurrence + FC epilogue, streamed over seq tiles.
        out_sbo, h_fin = stacked_rnn_fc(
            xp, self.w_hh0_t, self.w_cat_t, self.b_cat, self.fc_w_t, self.fc_b_row,
            n_layers=self.n_layers, compute_dtype=self.compute_dtype)

        # out.contiguous().view(-1, hidden) -> fc, with batch_first row ordering.
        out = jnp.transpose(out_sbo[:, :, : self.output_size], (1, 0, 2))
        out = out.reshape(batch * seq, self.output_size)
        hidden = h_fin[:, :, : self.hidden_dim]
        return out, hidden


# ----------------------------------------------------------------------------
# Pure-JAX reference (uses the original un-padded fp32 params).
# ----------------------------------------------------------------------------
def reference_forward(model, x):
    batch, seq, _ = x.shape
    cur = jnp.transpose(x, (1, 0, 2)).astype(jnp.float32)
    finals = []
    for (w_ih, w_hh, b_ih, b_hh) in model.rnn_params:
        def step(h, x_t):
            h_new = jnp.tanh(x_t @ w_ih.T + b_ih + h @ w_hh.T + b_hh)
            return h_new, h_new
        h0 = jnp.zeros((batch, model.hidden_dim), jnp.float32)
        h_last, ys = jax.lax.scan(step, h0, cur)
        cur = ys
        finals.append(h_last)
    hidden = jnp.stack(finals, axis=0)
    out_bsh = jnp.transpose(cur, (1, 0, 2)).reshape(batch * seq, model.hidden_dim)
    out = out_bsh @ model.fc_w.T + model.fc_b
    return out, hidden


def _check(model, x, rtol, atol):
    out, hidden = model(x)
    out = jax.block_until_ready(out)
    hidden = jax.block_until_ready(hidden)
    out_ref, hidden_ref = reference_forward(model, x)
    np.testing.assert_allclose(np.asarray(out), np.asarray(out_ref), rtol=rtol, atol=atol)
    np.testing.assert_allclose(np.asarray(hidden), np.asarray(hidden_ref), rtol=rtol, atol=atol)
    batch, seq, _ = x.shape
    assert out.shape == (batch * seq, model.output_size)
    assert hidden.shape == (model.n_layers, batch, model.hidden_dim)


if __name__ == "__main__":
    key = jax.random.PRNGKey(0)
    kp1, kx1, kp2, kx2 = jax.random.split(key, 4)

    # Primary small config consistent with the module's forward.
    batch, seq = 2, 8
    input_size, hidden_dim, output_size, n_layers = 8, 32, 4, 2
    m1 = PallasRNNModel(input_size, output_size, hidden_dim, n_layers, kp1)
    x1 = jax.random.normal(kx1, (batch, seq, input_size), jnp.float32)
    _check(m1, x1, rtol=1e-4, atol=1e-5)

    # Longer sequence: exercises the streamed seq grid (hidden carry across
    # grid steps) and the single-layer kernel branch.
    m2 = PallasRNNModel(input_size, output_size, hidden_dim, 1, kp2)
    x2 = jax.random.normal(kx2, (batch, 32, input_size), jnp.float32)
    _check(m2, x2, rtol=1e-4, atol=1e-5)

    # bf16 MXU-operand mode (fp32 accumulation / tanh / biases), loose tolerance.
    m3 = PallasRNNModel(input_size, output_size, hidden_dim, n_layers, kp1,
                        compute_dtype=jnp.bfloat16)
    _check(m3, x1, rtol=1e-1, atol=5e-2)

    print("KERNEL_OK")
</pallas_src>

<mosaic_0001>
module attributes {stable_mosaic.version = 11 : i64} {
  func.func @_matmul_bias_kernel(%arg0: i32, %arg1: memref<8x8xf32, #tpu.memory_space<vmem>>, %arg2: memref<8x128xf32, #tpu.memory_space<vmem>>, %arg3: memref<1x128xf32, #tpu.memory_space<vmem>>, %arg4: memref<8x128xf32, #tpu.memory_space<vmem>>) attributes {dimension_semantics = [#tpu.dimension_semantics<parallel>], iteration_bounds = array<i64: 2>, scalar_prefetch = 0 : i64, scratch_operands = 0 : i64, tpu.core_type = #tpu.core_type<tc>, window_params = [{transform_indices = @transform_0, window_bounds = array<i64: 8, 8>}, {pipeline_mode = #tpu.pipeline_mode<synchronous>, transform_indices = @transform_1, window_bounds = array<i64: 8, 128>}, {pipeline_mode = #tpu.pipeline_mode<synchronous>, transform_indices = @transform_2, window_bounds = array<i64: 1, 128>}, {transform_indices = @transform_3, window_bounds = array<i64: 8, 128>}]} {
    %c0 = arith.constant 0 : index
    %c0_0 = arith.constant 0 : index
    %0 = vector.load %arg1[%c0, %c0_0] : memref<8x8xf32, #tpu.memory_space<vmem>>, vector<8x8xf32>
    %c0_1 = arith.constant 0 : index
    %c0_2 = arith.constant 0 : index
    %1 = vector.load %arg2[%c0_1, %c0_2] : memref<8x128xf32, #tpu.memory_space<vmem>>, vector<8x128xf32>
    %cst = arith.constant dense<0.000000e+00> : vector<8x128xf32>
    %2 = tpu.matmul %0, %1, %cst {dimension_numbers = #tpu.dot_dimension_numbers<[1], [0], [0], [1], [0, 0, 1, 1], [], []>} : vector<8x8xf32>, vector<8x128xf32>, vector<8x128xf32> -> vector<8x128xf32>
    %c0_3 = arith.constant 0 : index
    %c0_4 = arith.constant 0 : index
    %3 = vector.load %arg3[%c0_3, %c0_4] : memref<1x128xf32, #tpu.memory_space<vmem>>, vector<1x128xf32>
    %4 = vector.broadcast %3 : vector<1x128xf32> to vector<8x128xf32>
    %5 = arith.addf %2, %4 : vector<8x128xf32>
    %c0_5 = arith.constant 0 : index
    %c0_6 = arith.constant 0 : index
    %6 = vector.load %arg4[%c0_5, %c0_6] : memref<8x128xf32, #tpu.memory_space<vmem>>, vector<8x128xf32>
    tpu.vector_store %arg4[%c0_5, %c0_6], %5 {strides = array<i32>} : memref<8x128xf32, #tpu.memory_space<vmem>>, vector<8x128xf32>,
    return
  }
  func.func @transform_0(%arg0: i32) -> (i32, i32) {
    %c0_i32 = arith.constant 0 : i32
    %c0_i32_0 = arith.constant 0 : i32
    return %arg0, %c0_i32 : i32, i32
  }
  func.func @transform_1(%arg0: i32) -> (i32, i32) {
    %c0_i32 = arith.constant 0 : i32
    %c0_i32_0 = arith.constant 0 : i32
    %c0_i32_1 = arith.constant 0 : i32
    return %c0_i32, %c0_i32_0 : i32, i32
  }
  func.func @transform_2(%arg0: i32) -> (i32, i32) {
    %c0_i32 = arith.constant 0 : i32
    %c0_i32_0 = arith.constant 0 : i32
    %c0_i32_1 = arith.constant 0 : i32
    return %c0_i32, %c0_i32_0 : i32, i32
  }
  func.func @transform_3(%arg0: i32) -> (i32, i32) {
    %c0_i32 = arith.constant 0 : i32
    %c0_i32_0 = arith.constant 0 : i32
    return %arg0, %c0_i32 : i32, i32
  }
}

</mosaic_0001>

<llo_original>
// kernel: tpu_custom_call.1
$region0: #{tpu_custom_call.1}
  #allocation0 [shape = 'u32[]', space=smem, size = 0x4, offset = 0x4, fixed_abs, tag = 'smem constant byte address 0x4 - core index']
  #allocation1 [shape = 'u32[144,128]{1,0:T(1,128)}', space=vmem, size = 0x12000, scoped, tag = 'internal scratch']
  %s0 = inlined_call_operand.vmem [shape: f32[16,8], index: 0, kind: input, shape index: {}]
  %s1 = inlined_call_operand.vmem [shape: f32[8,128], index: 1, kind: input, shape index: {}]
  %s2 = inlined_call_operand.vmem [shape: f32[1,128], index: 2, kind: input, shape index: {}]
  %s3 = inlined_call_operand.hbm [shape: f32[16,128], index: 3, kind: output, shape index: {}]
  %s4 = sld [smem:[#allocation0]]
  $region45: #{tpu_custom_call.1} parent=0
    _
  %s6 = ssub.s32 1, %s4
  %s7 = scalar_select 0, %s6, %s4
  $region1: #{tpu_custom_call.1} parent=0
    #allocation2 [shape = 'u8[8192]{0}', space=vmem, size = 0x2000, scoped, tag = 'output window, operand 0']
    #allocation3 [shape = 's32[2]{0}', space=sflag, size = 0x8, scoped, tag = 'scoped memory for tpu_custom_call.1']
    %8 = vsyncpa [#allocation3], 0
    %s9 = scalar_lea.sflag [#allocation3], 1
    %10 = vsyncpa %s9, 0
    loop: start=0, step=1, limit=4
    $region2: #{tpu_custom_call.1} parent=1 // loop_pre_header
      _
    $region3: #{tpu_custom_call.1} parent=1 // loop_header
      %s12 = sphi 0, %s16
      %p13 = scmp.ge.s32.totalorder %s12, 4
      %s22 = sphi 0, %s24
      %s25 = sphi 0, %s22
      %s26 = sphi 0, %s25
      %s42 = sphi 0, %s26
      %s46 = sphi 0, %s46
      %s48 = sphi 0, %s46
      %s49 = sphi 0, %s48
      %s63 = sphi 0, %s49
      %s67 = sphi 0, %s67
      %s69 = sphi 0, %s67
      %s70 = sphi 0, %s69
      %s84 = sphi 0, %s70
      %s90 = sphi 0, %s92
      %s93 = sphi 0, %s90
      %s94 = sphi 0, %s93
      %s110 = sphi 0, %s94
    $region4: #{tpu_custom_call.1} parent=1 // loop_header_branch
      %15 = sbr.rel (%p13) target = $region8
    $region5: #{tpu_custom_call.1} parent=1 // loop_body
      %s17 = ssub.s32 %s12, 1
      %s18 = ssub.s32 %s12, 2
      %s19 = sadd.s32 %s12, 1
      %s20 = ssub.s32 %s12, %s19
      %p21 = scmp.eq.s32.totalorder %s20, 0
      %s23 = sadd.s32 %s22, 1
      %s24 = scalar_select %p21, %s22, %s23
      %p27 = pneg %p21
      %p28 = scmp.eq.s32.totalorder %s12, 1
      %p29 = por %p27, %p28
      %p30 = scmp.ne.s32.totalorder %s22, %s25
      %p31 = scmp.eq.s32.totalorder %s12, 0
      %p32 = por %p30, %p31
      %p33 = scmp.ne.s32.totalorder %s22, %s25
      %p34 = scmp.eq.s32.totalorder %s17, 1
      %p35 = por %p33, %p34
      %p36 = scmp.ne.s32.totalorder %s25, %s26
      %p37 = scmp.eq.s32.totalorder %s17, 0
      %p38 = por %p36, %p37
      %p39 = scmp.ne.s32.totalorder %s25, %s26
      %p40 = scmp.eq.s32.totalorder %s18, 1
      %p41 = por %p39, %p40
      %p43 = scmp.ne.s32.totalorder %s26, %s42
      %p44 = scmp.eq.s32.totalorder %s18, 0
      %p45 = por %p43, %p44
      %s47 = sadd.s32 %s46, 1
      %p50 = scmp.eq.s32.totalorder %s12, 1
      %p51 = scmp.ne.s32.totalorder %s46, %s48
      %p52 = scmp.eq.s32.totalorder %s12, 0
      %p53 = por %p51, %p52
      %p54 = scmp.ne.s32.totalorder %s46, %s48
      %p55 = scmp.eq.s32.totalorder %s17, 1
      %p56 = por %p54, %p55
      %p57 = scmp.ne.s32.totalorder %s48, %s49
      %p58 = scmp.eq.s32.totalorder %s17, 0
      %p59 = por %p57, %p58
      %p60 = scmp.ne.s32.totalorder %s48, %s49
      %p61 = scmp.eq.s32.totalorder %s18, 1
      %p62 = por %p60, %p61
      %p64 = scmp.ne.s32.totalorder %s49, %s63
      %p65 = scmp.eq.s32.totalorder %s18, 0
      %p66 = por %p64, %p65
      %s68 = sadd.s32 %s67, 1
      %p71 = scmp.eq.s32.totalorder %s12, 1
      %p72 = scmp.ne.s32.totalorder %s67, %s69
      %p73 = scmp.eq.s32.totalorder %s12, 0
      %p74 = por %p72, %p73
      %p75 = scmp.ne.s32.totalorder %s67, %s69
      %p76 = scmp.eq.s32.totalorder %s17, 1
      %p77 = por %p75, %p76
      %p78 = scmp.ne.s32.totalorder %s69, %s70
      %p79 = scmp.eq.s32.totalorder %s17, 0
      %p80 = por %p78, %p79
      %p81 = scmp.ne.s32.totalorder %s69, %s70
      %p82 = scmp.eq.s32.totalorder %s18, 1
      %p83 = por %p81, %p82
      %p85 = scmp.ne.s32.totalorder %s70, %s84
      %p86 = scmp.eq.s32.totalorder %s18, 0
      %p87 = por %p85, %p86
      %s88 = ssub.s32 %s12, %s19
      %p89 = scmp.eq.s32.totalorder %s88, 0
      %s91 = sadd.s32 %s90, 1
      %s92 = scalar_select %p89, %s90, %s91
      %p95 = pneg %p89
      %p96 = scmp.eq.s32.totalorder %s12, 1
      %p97 = por %p95, %p96
      %p98 = scmp.ne.s32.totalorder %s90, %s93
      %p99 = scmp.eq.s32.totalorder %s12, 0
      %p100 = por %p98, %p99
      %p101 = scmp.ne.s32.totalorder %s90, %s93
      %p102 = scmp.eq.s32.totalorder %s17, 1
      %p103 = por %p101, %p102
      %p104 = scmp.ne.s32.totalorder %s93, %s94
      %p105 = scmp.eq.s32.totalorder %s17, 0
      %p106 = por %p104, %p105
      %p107 = scmp.ne.s32.totalorder %s93, %s94
      %p108 = scmp.eq.s32.totalorder %s18, 1
      %p109 = por %p107, %p108
      %p111 = scmp.ne.s32.totalorder %s94, %s110
      %p112 = scmp.eq.s32.totalorder %s18, 0
      %p113 = por %p111, %p112
      %p114 = scmp.le.s32.totalorder 1, %s12
      %p115 = scmp.lt.s32.totalorder %s12, 3
      %p116 = pnand %p114, %p115
      %p117 = pneg %p116
      // Predicated region
      $region9: #{tpu_custom_call.1} parent=5 // pred_check
        _
      $region10: #{tpu_custom_call.1} parent=5 // pred_check_branch
        %119 = sbr.rel (%p116) target = $region12
      $region11: #{tpu_custom_call.1} parent=5 // pred_region
        %s120 = ssub.s32 %s12, 1
        // Predicated region
        $region13: #{tpu_custom_call.1} parent=11 // pred_check
          %p121 = pneg %p59
        $region14: #{tpu_custom_call.1} parent=11 // pred_check_branch
          %123 = sbr.rel (%p121) target = $region16
        $region15: #{tpu_custom_call.1} parent=11 // pred_region
          _
        $region16: #{tpu_custom_call.1} parent=11 // pred_fallthru
          _
        // Predicated region
        $region17: #{tpu_custom_call.1} parent=11 // pred_check
          %p124 = pneg %p80
        $region18: #{tpu_custom_call.1} parent=11 // pred_check_branch
          %126 = sbr.rel (%p124) target = $region20
        $region19: #{tpu_custom_call.1} parent=11 // pred_region
          _
        $region20: #{tpu_custom_call.1} parent=11 // pred_fallthru
          _
      $region12: #{tpu_custom_call.1} parent=5 // pred_fallthru
        _
      %p127 = scmp.lt.s32.totalorder %s12, 2
      // Predicated region
      $region21: #{tpu_custom_call.1} parent=5 // pred_check
        %p128 = pneg %p127
      $region22: #{tpu_custom_call.1} parent=5 // pred_check_branch
        %130 = sbr.rel (%p128) target = $region24
      $region23: #{tpu_custom_call.1} parent=5 // pred_region
        // Predicated region
        $region25: #{tpu_custom_call.1} parent=23 // pred_check
          %p131 = pneg %p32
        $region26: #{tpu_custom_call.1} parent=23 // pred_check_branch
          %133 = sbr.rel (%p131) target = $region28
        $region27: #{tpu_custom_call.1} parent=23 // pred_region
          %p134 = scmp.lt.s32.totalorder %s12, 1
          %s135 = scalar_select %p134, %s12, 1
          %s136 = smul.addr %s135, 8
          %s137 = scalar_lea.vmem %s0, %s136
        $region28: #{tpu_custom_call.1} parent=23 // pred_fallthru
          _
      $region24: #{tpu_custom_call.1} parent=5 // pred_fallthru
        _
      %p138 = scmp.le.s32.totalorder 1, %s12
      %p139 = scmp.lt.s32.totalorder %s12, 3
      %p140 = pnand %p138, %p139
      %p141 = pneg %p140
      // Predicated region
      $region29: #{tpu_custom_call.1} parent=5 // pred_check
        _
      $region30: #{tpu_custom_call.1} parent=5 // pred_check_branch
        %143 = sbr.rel (%p140) target = $region32
      $region31: #{tpu_custom_call.1} parent=5 // pred_region
        %s144 = ssub.s32 %s12, 1
        %p145 = scmp.lt.s32.totalorder %s17, 1
        %s146 = scalar_select %p145, %s17, 1
        %s147 = smul.addr %s146, 8
        %s148 = scalar_lea.vmem %s0, %s147
        %p149 = pneg %p38
        %p150 = pneg %p35
        %p151 = pneg %p59
        %p152 = pneg %p56
        %p153 = pneg %p80
        %p154 = pneg %p77
        %p155 = pneg %p106
        %p156 = pneg %p103
        %s157 = sand.u32 %s93, 1
        %s158 = scalar_lea.sflag [#allocation3], %s157
        %s159 = sand.u32 %s93, 1
        %s160 = smul.addr %s159, 8
        %s161 = scalar_lea.vmem [#allocation2], %s160
        %p162 = scmp.lt.s32.totalorder %s17, 1
        %s163 = scalar_select %p162, %s17, 1
        %s164 = smul.addr %s163, 8
        %s165 = scalar_lea.vmem %s0, %s164
        %v166 = vld [vmem:[%s165] sm:$0xff]
        %v167 = vld [vmem:[%s1] sm:$0xff]
        %v168 = vld [vmem:[%s2] sm:$0x1]
        %v170 = vlaneseq
        %v171 = vshrl.u32 %v170, 7
        %v172 = vsub.s32 0, %v171
        %v173 = vrot.slane %v168, %v172
        %vm175 = vcmask 64512
        %v177 = vsel %vm175, %v166, 0
        %179 = vmatprep.subr.mxu0 0.0
        %180 = vmatpush1.msra.mxu0 %v167
        %181 = vmatprep.subr.mxu0 0.0
        %182 = vmatpush1.msra.mxu0 0.0
        %183 = vmatprep.subr.mxu0 0.0
        %184 = vmatpush1.msra.mxu0 0.0
        %185 = vmatprep.subr.mxu0 0.0
        %186 = vmatpush1.msra.mxu0 0.0
        %187 = vmatprep.subr.mxu0 0.0
        %188 = vmatpush1.msra.mxu0 0.0
        %189 = vmatprep.subr.mxu0 0.0
        %190 = vmatpush1.msra.mxu0 0.0
        %191 = vmatprep.subr.mxu0 0.0
        %192 = vmatpush1.msra.mxu0 0.0
        %193 = vmatprep.subr.mxu0 0.0
        %194 = vmatpush1.msra.mxu0 0.0
        %195 = vmatprep.subr.mxu0 0.0
        %196 = vmatpush1.msra.mxu0 0.0
        %197 = vmatprep.subr.mxu0 0.0
        %198 = vmatpush1.msra.mxu0 0.0
        %199 = vmatprep.subr.mxu0 0.0
        %200 = vmatpush1.msra.mxu0 0.0
        %201 = vmatprep.subr.mxu0 0.0
        %202 = vmatpush1.msra.mxu0 0.0
        %203 = vmatprep.subr.mxu0 0.0
        %204 = vmatpush1.msra.mxu0 0.0
        %205 = vmatprep.subr.mxu0 0.0
        %206 = vmatpush1.msra.mxu0 0.0
        %207 = vmatprep.subr.mxu0 0.0
        %208 = vmatpush1.msra.mxu0 0.0
        %209 = vmatprep.subr.mxu0 0.0
        %210 = vmatpush1.msra.mxu0 0.0
        %211 = vmatprep.subr.mxu0 0.0
        %212 = vmatpush1.msra.mxu0 0.0
        %213 = vmatprep.subr.mxu0 0.0
        %214 = vmatpush1.msra.mxu0 0.0
        %215 = vmatprep.subr.mxu0 0.0
        %216 = vmatpush1.msra.mxu0 0.0
        %217 = vmatprep.subr.mxu0 0.0
        %218 = vmatpush1.msra.mxu0 0.0
        %219 = vmatprep.subr.mxu0 0.0
        %220 = vmatpush1.msra.mxu0 0.0
        %221 = vmatprep.subr.mxu0 0.0
        %222 = vmatpush1.msra.mxu0 0.0
        %223 = vmatprep.subr.mxu0 0.0
        %224 = vmatpush1.msra.mxu0 0.0
        %225 = vmatprep.subr.mxu0 0.0
        %226 = vmatpush1.msra.mxu0 0.0
        %227 = vmatprep.subr.mxu0 0.0
        %228 = vmatpush1.msra.mxu0 0.0
        %229 = vmatprep.subr.mxu0 0.0
        %230 = vmatpush1.msra.mxu0 0.0
        %231 = vmatprep.subr.mxu0 0.0
        %232 = vmatpush1.msra.mxu0 0.0
        %233 = vmatprep.subr.mxu0 0.0
        %234 = vmatpush1.msra.mxu0 0.0
        %235 = vmatprep.subr.mxu0 0.0
        %236 = vmatpush1.msra.mxu0 0.0
        %237 = vmatprep.subr.mxu0 0.0
        %238 = vmatpush1.msra.mxu0 0.0
        %239 = vmatprep.subr.mxu0 0.0
        %240 = vmatpush1.msra.mxu0 0.0
        %241 = vmatprep.subr.mxu0 0.0
        %242 = vmatpush1.msra.mxu0 0.0
        %243 = vmatprep.mubr.f32.mxu0 0.0
        %244 = vmatmul.mubr.f32.gmra.mrb[0].mxu0 %v177
        %v245 = vpop.f32.mrb[0].mxu0
        %v246 = vadd.f32 %v173, %v245
        %v247 = vpop.f32.mrb[0].mxu0
        %248 = vdwg.mxu0
        %249 = vst [vmem:[%s161] sm:$0xff] %v246
        %s250 = sand.u32 %s93, 1
        %s251 = scalar_lea.sflag [#allocation3], %s250
        %s252 = sand.u32 %s93, 1
        %s253 = smul.addr %s252, 8
        %s254 = scalar_lea.vmem [#allocation2], %s253
        // Predicated region
        $region33: #{tpu_custom_call.1} parent=31 // pred_check
          %p255 = pneg %p103
        $region34: #{tpu_custom_call.1} parent=31 // pred_check_branch
          %257 = sbr.rel (%p255) target = $region36
        $region35: #{tpu_custom_call.1} parent=31 // pred_region
          %s259 = ssub.s32 128, 128
          %260 = vsyncadd %s251, %s259
          %s261 = smul.addr %s17, 128
          %s262 = scalar_lea.hbm %s3, %s261
          %s264 = sshll.u32 %s254, 4
          %s265 = int_to_ptr.vmem [resolvable:$true] %s264
          %267 = dma.vmem_to_hbm [thread:$0]  %s265, 128, %s262, %s251
        $region36: #{tpu_custom_call.1} parent=31 // pred_fallthru
          _
      $region32: #{tpu_custom_call.1} parent=5 // pred_fallthru
        _
      %p268 = scmp.le.s32.totalorder 2, %s12
      // Predicated region
      $region37: #{tpu_custom_call.1} parent=5 // pred_check
        %p269 = pneg %p268
      $region38: #{tpu_custom_call.1} parent=5 // pred_check_branch
        %271 = sbr.rel (%p269) target = $region40
      $region39: #{tpu_custom_call.1} parent=5 // pred_region
        %s272 = ssub.s32 %s12, 2
        // Predicated region
        $region41: #{tpu_custom_call.1} parent=39 // pred_check
          %p273 = pneg %p109
        $region42: #{tpu_custom_call.1} parent=39 // pred_check_branch
          %275 = sbr.rel (%p273) target = $region44
        $region43: #{tpu_custom_call.1} parent=39 // pred_region
          %s276 = sand.u32 %s94, 1
          %s277 = scalar_lea.sflag [#allocation3], %s276
          %s278 = sand.u32 %s94, 1
          %s279 = smul.addr %s278, 8
          %s280 = scalar_lea.vmem [#allocation2], %s279
          %281 = dma.done %s277, 128
        $region44: #{tpu_custom_call.1} parent=39 // pred_fallthru
          _
      $region40: #{tpu_custom_call.1} parent=5 // pred_fallthru
        _
    $region6: #{tpu_custom_call.1} parent=1 // loop_footer
      %s16 = sadd.s32 1, %s12
    $region7: #{tpu_custom_call.1} parent=1 // loop_footer_branch
      %11 = sbr.rel target = $region3
    $region8: #{tpu_custom_call.1} parent=1 // loop_exit
      _
    %282 = vsyncpa [#allocation3], 1
    %s283 = scalar_lea.sflag [#allocation3], 1
    %284 = vsyncpa %s283, 1

</llo_original>
